<compile_context>
chip_gen: v7x
topology: tpu7x:2x2x1
jax: 0.10.0
libtpu: 0.0.40
codegen_flags: <defaults>
</compile_context>

<pallas_src>
import functools

import jax
import jax.numpy as jnp
from jax import lax
from jax.experimental import pallas as pl
from jax.experimental.pallas import tpu as pltpu


# ---------------------------------------------------------------------------
# Kernel 1: scalar atomic energies (F == 1).  Everything lane-major, no MXU.
# ---------------------------------------------------------------------------
def _atom_reduce_f1_kernel(batch_ref, src_ref, out_ref, acc_ref, *,
                           constant, n_atoms):
    i = pl.program_id(0)
    tile_n = src_ref.shape[1]
    g_pad = acc_ref.shape[0]
    last = pl.num_programs(0) - 1

    @pl.when(i == 0)
    def _init():
        acc_ref[...] = jnp.zeros_like(acc_ref)

    ids = batch_ref[...]                               # (1, TN) int32, lane-major
    graphs = lax.broadcasted_iota(jnp.int32, (g_pad, 1), 0)

    def accumulate(src):
        # mask[g, n] = atom n belongs to graph g.  Graphs live on sublanes so
        # the mask is only (G_pad, TN) and the segment sum is a lane reduction
        # (XLU slot, hidden under the streaming DMA).
        contrib = jnp.where(graphs == ids, src, 0.0)   # (G_pad, TN) f32
        acc_ref[...] += jnp.sum(contrib, axis=1, keepdims=True)

    if n_atoms % tile_n != 0:
        # Ragged last tile: only that step pays the iota+compare+select that
        # zeros OOB garbage (NaN-safe).  Steady-state steps are mask-free.
        @pl.when(i != last)
        def _steady():
            accumulate(src_ref[...].astype(jnp.float32))

        @pl.when(i == last)
        def _ragged():
            col = lax.broadcasted_iota(jnp.int32, (1, tile_n), 1) + i * tile_n
            src = jnp.where(col < n_atoms,
                            src_ref[...].astype(jnp.float32), 0.0)
            accumulate(src)
    else:
        accumulate(src_ref[...].astype(jnp.float32))

    @pl.when(i == last)
    def _finalize():
        out_ref[...] = (acc_ref[...] * constant).astype(out_ref.dtype)


# ---------------------------------------------------------------------------
# Kernel 2: feature-valued energies (F > 1).  One-hot segment matmul on MXU.
# ---------------------------------------------------------------------------
def _atom_reduce_kernel(batch_ref, src_ref, out_ref, acc_ref, *,
                        constant, n_atoms, precision):
    i = pl.program_id(1)                               # atom (reduction) axis
    tile_n = src_ref.shape[0]
    g_pad = acc_ref.shape[0]
    last = pl.num_programs(1) - 1

    @pl.when(i == 0)
    def _init():
        acc_ref[...] = jnp.zeros_like(acc_ref)

    ids = batch_ref[...]                               # (1, TN) int32, lane-major
    graphs = lax.broadcasted_iota(jnp.int32, (g_pad, 1), 0)

    def accumulate(src):
        # one_hot[g, n] = 1 iff atom n belongs to graph g, built directly in
        # (G_pad, TN) orientation: contraction (atom) axis on the one-hot lane
        # axis and on src's sublane axis -> MXU-native A @ B, no relayout.
        one_hot = (graphs == ids).astype(jnp.float32)  # (G_pad, TN)
        if src.dtype == jnp.bfloat16:
            one_hot = one_hot.astype(jnp.bfloat16)     # bf16 MXU, f32 acc (exact)
        acc_ref[...] += jnp.dot(one_hot, src,
                                preferred_element_type=jnp.float32,
                                precision=precision)

    if n_atoms % tile_n != 0:
        # Ragged tail handled only on the last step; src zero-fill (not id
        # masking) so OOB NaN/Inf garbage can never reach the MXU as 0*NaN.
        @pl.when(i != last)
        def _steady():
            accumulate(src_ref[...])

        @pl.when(i == last)
        def _ragged():
            s = src_ref[...]
            row = lax.broadcasted_iota(jnp.int32, (tile_n, 1), 0) + i * tile_n
            accumulate(jnp.where(row < n_atoms, s, jnp.zeros_like(s)))
    else:
        accumulate(src_ref[...])

    @pl.when(i == last)
    def _finalize():
        out_ref[...] = (acc_ref[...] * constant).astype(out_ref.dtype)


# ---------------------------------------------------------------------------
# Wrapper
# ---------------------------------------------------------------------------
def _round_up(x, m):
    return ((x + m - 1) // m) * m


def _tpu_vmem_capacity_bytes():
    """Physical VMEM capacity, or None if it cannot be queried."""
    try:
        info = pltpu.get_tpu_info()
        cap = getattr(info, "vmem_capacity_bytes", None)
        if cap:
            return int(cap)
    except Exception:
        pass
    return None


def _auto_tile_n(n, per_atom_bytes, fixed_bytes, budget_bytes, cap):
    """Largest atom tile (multiple of 128, <= cap) fitting the VMEM budget."""
    tile = (budget_bytes - fixed_bytes) // max(per_atom_bytes, 1)
    tile = max(128, min(cap, (tile // 128) * 128))
    return n if n <= tile else tile          # n <= tile -> one full-array block


def atom_reduce(atomic_energy, batch, num_graphs, *, constant=1.0,
                tile_n=None, tile_f=None):
    """Pallas equivalent of AtomReduce.forward (batch mode, reduce='sum').

    atomic_energy: (N_atoms, F) float array   (KEY.ATOMIC_ENERGY)
    batch:         (N_atoms,)   int graph index per atom (KEY.BATCH)
    num_graphs:    static int; for module parity must equal int(batch.max()) + 1
                   (ids >= num_graphs land in padded rows and are discarded).
    returns:       (num_graphs, F) = segment_sum(atomic_energy, batch) * constant
    """
    n, f = atomic_energy.shape
    dtype = atomic_energy.dtype
    dsize = jnp.dtype(dtype).itemsize
    g_pad = max(8, _round_up(num_graphs, 8))           # sublane-align graph axis
    constant = float(constant)

    # Per-generation VMEM budgeting: v5e/v6e have 128 MiB physical VMEM, v7x
    # has 64 MiB.  The budget below already counts double-buffered inputs.
    cap_bytes = _tpu_vmem_capacity_bytes()
    if cap_bytes is not None and cap_bytes >= (96 << 20):      # v5e / v6e
        vmem_limit, budget, is_v7x = 64 << 20, 40 << 20, False
    else:                                                      # v7x or unknown
        vmem_limit, budget, is_v7x = 32 << 20, 22 << 20, cap_bytes is not None

    ids = batch.astype(jnp.int32).reshape(1, n)         # free reshape, lane-major

    if f == 1:
        # ------- scalar-energy fast path: lane-major mask + reduce ----------
        src = atomic_energy.reshape(1, n)               # free reshape
        per_atom = 2 * 8 * dsize + 2 * 8 * 4 + g_pad * 4 + 16
        if tile_n is None:
            tile_n = _auto_tile_n(n, per_atom, 0, budget, cap=65536)
        assert tile_n == n or tile_n % 128 == 0, \
            "tile_n must equal N or be a multiple of 128"
        grid = (pl.cdiv(n, tile_n),)
        cost = pl.CostEstimate(flops=3 * g_pad * n, transcendentals=0,
                               bytes_accessed=n * dsize + n * 4 + g_pad * dsize)
        out = pl.pallas_call(
            functools.partial(_atom_reduce_f1_kernel,
                              constant=constant, n_atoms=n),
            out_shape=jax.ShapeDtypeStruct((g_pad, 1), dtype),
            grid_spec=pltpu.PrefetchScalarGridSpec(
                num_scalar_prefetch=0,
                grid=grid,
                in_specs=[
                    pl.BlockSpec((1, tile_n), lambda i: (0, i)),   # graph ids
                    pl.BlockSpec((1, tile_n), lambda i: (0, i)),   # energies
                ],
                out_specs=pl.BlockSpec((g_pad, 1), lambda i: (0, 0)),
                scratch_shapes=[pltpu.VMEM((g_pad, 1), jnp.float32)],
            ),
            compiler_params=pltpu.CompilerParams(
                dimension_semantics=("arbitrary",),      # reduction over atoms
                vmem_limit_bytes=vmem_limit,
            ),
            cost_estimate=cost,
        )(ids, src)
        return out[:num_graphs, :]

    # ---------- general path: one-hot segment matmul on the MXU -------------
    if tile_f is None:
        # Single F tile (contiguous rows, one ids DMA) on single-TC chips; on
        # v7x split F in two 128-multiples so the parallel axis feeds both TCs.
        if is_v7x and f >= 256 and f % 256 == 0:
            tile_f = f // 2
        else:
            tile_f = f
    lane_f = _round_up(tile_f, 128)                      # VMEM lane padding
    per_atom = 2 * lane_f * dsize + 2 * 8 * 4 + g_pad * 4 + lane_f * 4
    fixed = 3 * g_pad * lane_f * 4                       # acc + out buffers
    if tile_n is None:
        tile_n = _auto_tile_n(n, per_atom, fixed, budget, cap=32768)
    assert tile_n == n or tile_n % 128 == 0, \
        "tile_n must equal N or be a multiple of 128"

    precision = lax.Precision.HIGHEST if dtype == jnp.float32 else None
    grid = (pl.cdiv(f, tile_f), pl.cdiv(n, tile_n))
    cost = pl.CostEstimate(flops=2 * g_pad * n * f, transcendentals=0,
                           bytes_accessed=n * f * dsize + n * 4 + g_pad * f * dsize)
    out = pl.pallas_call(
        functools.partial(_atom_reduce_kernel, constant=constant,
                          n_atoms=n, precision=precision),
        out_shape=jax.ShapeDtypeStruct((g_pad, f), dtype),
        grid_spec=pltpu.PrefetchScalarGridSpec(
            num_scalar_prefetch=0,
            grid=grid,
            in_specs=[
                pl.BlockSpec((1, tile_n), lambda jf, i: (0, i)),        # ids
                pl.BlockSpec((tile_n, tile_f), lambda jf, i: (i, jf)),  # energies
            ],
            out_specs=pl.BlockSpec((g_pad, tile_f), lambda jf, i: (0, jf)),
            scratch_shapes=[pltpu.VMEM((g_pad, tile_f), jnp.float32)],
        ),
        compiler_params=pltpu.CompilerParams(
            # independent F tiles -> second TensorCore on v7x; atoms are the
            # resident-accumulator reduction axis.
            dimension_semantics=("parallel", "arbitrary"),
            vmem_limit_bytes=vmem_limit,
        ),
        cost_estimate=cost,
    )(ids, atomic_energy)
    return out[:num_graphs, :]


if __name__ == "__main__":
    key = jax.random.PRNGKey(0)
    k_e, k_b, k_e2, k_b2, k_e3 = jax.random.split(key, 5)

    # Case 1: the module's real use case -- per-atom scalar energies (F == 1).
    n_atoms, num_graphs, constant = 300, 4, 0.5
    e1 = jax.random.normal(k_e, (n_atoms, 1), jnp.float32)
    b1 = jax.random.randint(k_b, (n_atoms,), 0, num_graphs, jnp.int32)

    got1 = jax.block_until_ready(atom_reduce(e1, b1, num_graphs,
                                             constant=constant))
    ref1 = jax.ops.segment_sum(e1, b1, num_segments=num_graphs) * constant
    assert got1.shape == (num_graphs, 1)
    assert jnp.allclose(got1, ref1, atol=1e-5, rtol=1e-5)

    # Case 2: same data, forced small tiles -> multi-tile + ragged-tail gating.
    got1b = jax.block_until_ready(
        atom_reduce(e1, b1, num_graphs, constant=constant, tile_n=128))
    assert jnp.allclose(got1b, ref1, atol=1e-5, rtol=1e-5)

    # Case 3: feature-valued energies in bf16 -> general one-hot-matmul path
    # (multi-tile, ragged tail gated to the last step, bf16 MXU with f32 acc).
    feat, num_graphs2 = 32, 3
    e2 = jax.random.normal(k_e2, (n_atoms, feat), jnp.float32).astype(jnp.bfloat16)
    b2 = jax.random.randint(k_b2, (n_atoms,), 0, num_graphs2, jnp.int32)

    got2 = jax.block_until_ready(
        atom_reduce(e2, b2, num_graphs2, constant=1.0, tile_n=128))
    ref2 = jax.ops.segment_sum(e2.astype(jnp.float32), b2,
                               num_segments=num_graphs2)
    assert got2.shape == (num_graphs2, feat)
    assert jnp.allclose(got2.astype(jnp.float32), ref2, atol=1e-3, rtol=2e-2)

    # Case 4: f32 feature-valued energies -> MXU path with precision=HIGHEST.
    e3 = jax.random.normal(k_e3, (n_atoms, 8), jnp.float32)
    got3 = jax.block_until_ready(
        atom_reduce(e3, b2, num_graphs2, constant=2.0, tile_n=128))
    ref3 = jax.ops.segment_sum(e3, b2, num_segments=num_graphs2) * 2.0
    assert jnp.allclose(got3, ref3, atol=1e-4, rtol=1e-4)

    print("KERNEL_OK")
</pallas_src>

<mosaic_0001>
module attributes {stable_mosaic.version = 11 : i64} {
  func.func @_atom_reduce_f1_kernel(%arg0: i32, %arg1: memref<1x300xi32, #tpu.memory_space<vmem>>, %arg2: memref<1x300xf32, #tpu.memory_space<vmem>>, %arg3: memref<8x1xf32, #tpu.memory_space<vmem>>, %arg4: memref<8x1xf32, #tpu.memory_space<vmem>>) attributes {dimension_semantics = [#tpu.dimension_semantics<arbitrary>], iteration_bounds = array<i64: 1>, scalar_prefetch = 0 : i64, scratch_operands = 1 : i64, tpu.core_type = #tpu.core_type<tc>, window_params = [{transform_indices = @transform_0, window_bounds = array<i64: 1, 300>}, {transform_indices = @transform_1, window_bounds = array<i64: 1, 300>}, {pipeline_mode = #tpu.pipeline_mode<synchronous>, transform_indices = @transform_2, window_bounds = array<i64: 8, 1>}]} {
    %c0_i32 = arith.constant 0 : i32
    %0 = arith.cmpi eq, %arg0, %c0_i32 : i32
    %1 = arith.extui %0 : i1 to i32
    %c0_i32_0 = arith.constant 0 : i32
    %2 = arith.cmpi ne, %1, %c0_i32_0 : i32
    scf.if %2 {
      %cst_11 = arith.constant 0.000000e+00 : f32
      %21 = vector.broadcast %cst_11 : f32 to vector<8x1xf32>
      %c0_12 = arith.constant 0 : index
      %c0_13 = arith.constant 0 : index
      %22 = vector.load %arg4[%c0_12, %c0_13] : memref<8x1xf32, #tpu.memory_space<vmem>>, vector<8x1xf32>
      tpu.vector_store %arg4[%c0_12, %c0_13], %21 {strides = array<i32>} : memref<8x1xf32, #tpu.memory_space<vmem>>, vector<8x1xf32>,
    } else {
    }
    %c0 = arith.constant 0 : index
    %c0_1 = arith.constant 0 : index
    %3 = vector.load %arg1[%c0, %c0_1] : memref<1x300xi32, #tpu.memory_space<vmem>>, vector<1x300xi32>
    %4 = tpu.iota {dimensions = array<i32: 0>} : vector<8x1xi32>
    %c0_2 = arith.constant 0 : index
    %c0_3 = arith.constant 0 : index
    %5 = vector.load %arg2[%c0_2, %c0_3] : memref<1x300xf32, #tpu.memory_space<vmem>>, vector<1x300xf32>
    %6 = vector.broadcast %4 : vector<8x1xi32> to vector<8x300xi32>
    %7 = vector.broadcast %3 : vector<1x300xi32> to vector<8x300xi32>
    %8 = arith.cmpi eq, %6, %7 : vector<8x300xi32>
    %cst = arith.constant 0.000000e+00 : f32
    %9 = vector.shape_cast %5 : vector<1x300xf32> to vector<1x300xf32>
    %10 = vector.broadcast %9 : vector<1x300xf32> to vector<8x300xf32>
    %11 = vector.broadcast %cst : f32 to vector<8x300xf32>
    %12 = arith.select %8, %10, %11 : vector<8x300xi1>, vector<8x300xf32>
    %c0_4 = arith.constant 0 : index
    %c0_5 = arith.constant 0 : index
    %13 = vector.load %arg4[%c0_4, %c0_5] : memref<8x1xf32, #tpu.memory_space<vmem>>, vector<8x1xf32>
    %cst_6 = arith.constant dense<0.000000e+00> : vector<8xf32>
    %14 = vector.multi_reduction <add>, %12, %cst_6 [1] : vector<8x300xf32> to vector<8xf32>
    %15 = vector.shape_cast %14 : vector<8xf32> to vector<8x1xf32>
    %16 = arith.addf %13, %15 : vector<8x1xf32>
    %c0_7 = arith.constant 0 : index
    %c0_8 = arith.constant 0 : index
    %17 = vector.load %arg4[%c0_7, %c0_8] : memref<8x1xf32, #tpu.memory_space<vmem>>, vector<8x1xf32>
    tpu.vector_store %arg4[%c0_7, %c0_8], %16 {strides = array<i32>} : memref<8x1xf32, #tpu.memory_space<vmem>>, vector<8x1xf32>,
    %c0_i32_9 = arith.constant 0 : i32
    %18 = arith.cmpi eq, %arg0, %c0_i32_9 : i32
    %19 = arith.extui %18 : i1 to i32
    %c0_i32_10 = arith.constant 0 : i32
    %20 = arith.cmpi ne, %19, %c0_i32_10 : i32
    scf.if %20 {
      %c0_11 = arith.constant 0 : index
      %c0_12 = arith.constant 0 : index
      %21 = vector.load %arg4[%c0_11, %c0_12] : memref<8x1xf32, #tpu.memory_space<vmem>>, vector<8x1xf32>
      %cst_13 = arith.constant 5.000000e-01 : f32
      %22 = vector.broadcast %cst_13 : f32 to vector<8x1xf32>
      %23 = arith.mulf %21, %22 : vector<8x1xf32>
      %c0_14 = arith.constant 0 : index
      %c0_15 = arith.constant 0 : index
      %24 = vector.load %arg3[%c0_14, %c0_15] : memref<8x1xf32, #tpu.memory_space<vmem>>, vector<8x1xf32>
      tpu.vector_store %arg3[%c0_14, %c0_15], %23 {strides = array<i32>} : memref<8x1xf32, #tpu.memory_space<vmem>>, vector<8x1xf32>,
    } else {
    }
    return
  }
  func.func @transform_0(%arg0: i32) -> (i32, i32) {
    %c0_i32 = arith.constant 0 : i32
    %c0_i32_0 = arith.constant 0 : i32
    return %c0_i32, %arg0 : i32, i32
  }
  func.func @transform_1(%arg0: i32) -> (i32, i32) {
    %c0_i32 = arith.constant 0 : i32
    %c0_i32_0 = arith.constant 0 : i32
    return %c0_i32, %arg0 : i32, i32
  }
  func.func @transform_2(%arg0: i32) -> (i32, i32) {
    %c0_i32 = arith.constant 0 : i32
    %c0_i32_0 = arith.constant 0 : i32
    %c0_i32_1 = arith.constant 0 : i32
    return %c0_i32, %c0_i32_0 : i32, i32
  }
}

</mosaic_0001>

<llo_original>
// kernel: tpu_custom_call.1
$region0: #{tpu_custom_call.1}
  #allocation0 [shape = 'u32[]', space=smem, size = 0x4, offset = 0x4, fixed_abs, tag = 'smem constant byte address 0x4 - core index']
  #allocation1 [shape = 'u32[144,128]{1,0:T(1,128)}', space=vmem, size = 0x12000, scoped, tag = 'internal scratch']
  #allocation2 [shape = 'f32[8,1]{1,0:T(8,128)}', space=vmem, size = 0x1000, scoped, tag = 'scratch operand']
  %s0 = inlined_call_operand.hbm [shape: s32[1,300], index: 0, kind: input, shape index: {}]
  %s1 = inlined_call_operand.vmem [shape: f32[1,300], index: 1, kind: input, shape index: {}]
  %s2 = inlined_call_operand.vmem [shape: f32[8,1], index: 2, kind: output, shape index: {}]
  %s3 = sld [smem:[#allocation0]]
  $region30: #{tpu_custom_call.1} parent=0
    _
  %s5 = ssub.s32 1, %s3
  %s6 = scalar_select 0, %s5, %s3
  $region1: #{tpu_custom_call.1} parent=0
    #allocation3 [shape = 'u8[1536]{0}', space=vmem, size = 0x800, scoped, tag = 'input window, operand 0, single buffered']
    #allocation4 [shape = 's32[1]{0}', space=sflag, size = 0x4, scoped, tag = 'scoped memory for tpu_custom_call.1']
    %7 = vsyncpa [#allocation4], 0
    // Predicated region
    $region2: #{tpu_custom_call.1} parent=1 // pred_check
      _
    $region3: #{tpu_custom_call.1} parent=1 // pred_check_branch
      %9 = sbr.rel (0) target = $region5
    $region4: #{tpu_custom_call.1} parent=1 // pred_region
      %s11 = ssub.s32 48, 48
      %12 = vsyncadd [#allocation4], %s11
      %s14 = sshll.u32 [#allocation3], 4
      %s15 = int_to_ptr.vmem [resolvable:$true] %s14
      %17 = dma.hbm_to_vmem [thread:$0]  %s0, 48, %s15, [#allocation4]
    $region5: #{tpu_custom_call.1} parent=1 // pred_fallthru
      _
    // Predicated region
    $region6: #{tpu_custom_call.1} parent=1 // pred_check
      _
    $region7: #{tpu_custom_call.1} parent=1 // pred_check_branch
      %19 = sbr.rel (0) target = $region9
    $region8: #{tpu_custom_call.1} parent=1 // pred_region
      _
    $region9: #{tpu_custom_call.1} parent=1 // pred_fallthru
      _
    // Predicated region
    $region10: #{tpu_custom_call.1} parent=1 // pred_check
      _
    $region11: #{tpu_custom_call.1} parent=1 // pred_check_branch
      %21 = sbr.rel (0) target = $region13
    $region12: #{tpu_custom_call.1} parent=1 // pred_region
      %22 = dma.done [#allocation4], 48
    $region13: #{tpu_custom_call.1} parent=1 // pred_fallthru
      _
    %p23 = scmp.eq.s32.totalorder 0, 0
    // Predicated region
    $region14: #{tpu_custom_call.1} parent=1 // pred_check
      %p24 = pneg %p23
    $region15: #{tpu_custom_call.1} parent=1 // pred_check_branch
      %26 = sbr.rel (%p24) target = $region17
    $region16: #{tpu_custom_call.1} parent=1 // pred_region
      %vm27 = vcmask 7168
      %28 = vst.msk [vmem:[#allocation2] sm:$0xff] %vm27, 0.0
    $region17: #{tpu_custom_call.1} parent=1 // pred_fallthru
      _
    %v29 = vld [vmem:[#allocation3] sm:$0x7]
    %v30 = vlaneseq
    %v31 = vshrl.u32 %v30, 7
    %v32 = vld [vmem:[%s1] sm:$0x7]
    %v33 = vlaneseq
    %v34 = vshrl.u32 %v33, 7
    %v35 = vsub.s32 0, %v34
    %v36 = vrot.slane %v29, %v35
    %v37 = vlaneseq
    %v38 = vshrl.u32 %v37, 7
    %v39 = vsub.s32 1, %v38
    %v40 = vrot.slane %v29, %v39
    %v41 = vlaneseq
    %v42 = vshrl.u32 %v41, 7
    %v43 = vsub.s32 2, %v42
    %v44 = vrot.slane %v29, %v43
    %vm45 = vcmp.eq.s32.totalorder %v31, %v36
    %vm46 = vcmp.eq.s32.totalorder %v31, %v40
    %vm47 = vcmp.eq.s32.totalorder %v31, %v44
    %v49 = vlaneseq
    %v50 = vshrl.u32 %v49, 7
    %v51 = vsub.s32 0, %v50
    %v52 = vrot.slane %v32, %v51
    %v53 = vlaneseq
    %v54 = vshrl.u32 %v53, 7
    %v55 = vsub.s32 1, %v54
    %v56 = vrot.slane %v32, %v55
    %v57 = vlaneseq
    %v58 = vshrl.u32 %v57, 7
    %v59 = vsub.s32 2, %v58
    %v60 = vrot.slane %v32, %v59
    %v64 = vsel %vm45, %v52, 0.0
    %v65 = vsel %vm46, %v56, 0.0
    %v66 = vsel %vm47, %v60, 0.0
    %v67 = vld [vmem:[#allocation2] sm:$0xff]
    %v68 = vadd.f32 %v64, %v65
    %vm69 = vcmask 359424
    %v70 = vsel %vm69, %v66, 0.0
    %v71 = vadd.f32 %v68, %v70
    %72 = vadd.xlane.f32.xlu0 %v71
    %v73 = vpop.xlane.xlu0 %72
    %v74 = vadd.f32 %v67, %v73
    %vm75 = vcmask 7168
    %76 = vst.msk [vmem:[#allocation2] sm:$0xff] %vm75, %v74
    // Predicated region
    $region18: #{tpu_custom_call.1} parent=1 // pred_check
      %p77 = pneg %p23
    $region19: #{tpu_custom_call.1} parent=1 // pred_check_branch
      %79 = sbr.rel (%p77) target = $region21
    $region20: #{tpu_custom_call.1} parent=1 // pred_region
      %v80 = vld [vmem:[#allocation2] sm:$0xff]
      %v81 = vmul.f32 %v80, 0.5
      %82 = vst.msk [vmem:[%s2] sm:$0xff] %vm75, %v81
    $region21: #{tpu_custom_call.1} parent=1 // pred_fallthru
      _
    // Predicated region
    $region22: #{tpu_custom_call.1} parent=1 // pred_check
      _
    $region23: #{tpu_custom_call.1} parent=1 // pred_check_branch
      %84 = sbr.rel (0) target = $region25
    $region24: #{tpu_custom_call.1} parent=1 // pred_region
      _
    $region25: #{tpu_custom_call.1} parent=1 // pred_fallthru
      _
    // Predicated region
    $region26: #{tpu_custom_call.1} parent=1 // pred_check
      _
    $region27: #{tpu_custom_call.1} parent=1 // pred_check_branch
      %86 = sbr.rel (0) target = $region29
    $region28: #{tpu_custom_call.1} parent=1 // pred_region
      _
    $region29: #{tpu_custom_call.1} parent=1 // pred_fallthru
      _
    %87 = vsyncpa [#allocation4], 1

</llo_original>
